<compile_context>
chip_gen: v7x
topology: tpu7x:2x2x1
jax: 0.10.0
libtpu: 0.0.40
codegen_flags: <defaults>
</compile_context>

<pallas_src>
import jax
import jax.numpy as jnp
import numpy as np
from jax.experimental import pallas as pl
from jax.experimental.pallas import tpu as pltpu

BN_EPS = 1e-5


def channelmix_kernel(x_ref, w1_ref, w2_ref, bias_ref, o_ref):
    # x_ref : (C, TN) tile — channels on sublanes, tokens on lanes.
    # w1_ref: (C, C)  BN-folded first 1x1-conv weight   (out, in)
    # w2_ref: (C, C)  LayerScale-folded second weight    (out, in)
    # bias  : (C, 2)  f32; column 0 = b1', column 1 = b2'
    x = x_ref[...]
    b = bias_ref[...]

    # MLP: (W1' @ x + b1') -> ReLU -> (W2' @ h + b2'), f32 accumulation on MXU.
    h = jnp.dot(w1_ref[...], x, preferred_element_type=jnp.float32) + b[:, 0:1]
    h = jnp.maximum(h, 0.0)
    y = jnp.dot(w2_ref[...], h.astype(w2_ref.dtype),
                preferred_element_type=jnp.float32) + b[:, 1:2]

    # Residual (BN / LayerScale already folded into the weights).
    o_ref[...] = (x.astype(jnp.float32) + y).astype(o_ref.dtype)


def _round_up(v, m):
    return ((v + m - 1) // m) * m


def channel_mix(tokens, params, *, tn=1024, donate_tokens=False):
    """tokens: (B, C, N) -> (B, C, N).  BatchNorm in eval mode (running stats).

    tn: token tile (rounded to a multiple of 128).  1024 is a good default on
        v6e/v7x; the explicit vmem_limit_bytes below keeps it valid on v5e too.
    donate_tokens: alias the input HBM buffer with the output (only if the
        caller does not reuse `tokens` afterwards).
    """
    B, C, N = tokens.shape
    w1, b1, w2, b2, gamma, beta, mean, var, scale = params

    # ---- Fold BatchNorm + LayerScale into the conv weights (once, in f32).
    inv_std = jax.lax.rsqrt(var.astype(jnp.float32) + BN_EPS)
    a = gamma.astype(jnp.float32) * inv_std                     # (C,)
    c = beta.astype(jnp.float32) - mean.astype(jnp.float32) * a
    w1f = w1.astype(jnp.float32) * a[None, :]                   # (Cout, Cin)
    b1f = w1.astype(jnp.float32) @ c + b1.astype(jnp.float32)   # (C,)
    w2f = scale.astype(jnp.float32)[:, None] * w2.astype(jnp.float32)
    b2f = scale.astype(jnp.float32) * b2.astype(jnp.float32)

    compute_dtype = tokens.dtype                 # feed MXU in the token dtype
    w1f = w1f.astype(compute_dtype)
    w2f = w2f.astype(compute_dtype)
    bias = jnp.stack([b1f, b2f], axis=1)         # (C, 2), kept in f32

    # ---- Token tiling: lane-dense tiles (multiple of 128).  No padding of N:
    # Pallas handles the ragged last block (padded reads, masked OOB writes).
    tn_eff = int(min(tn, _round_up(N, 128)))
    grid = (B, pl.cdiv(N, tn_eff))

    # ---- Explicit VMEM budget: x/out tiles double-buffered, constants single.
    act_bytes = jnp.dtype(compute_dtype).itemsize
    vmem_need = (2 * 2 * C * tn_eff * act_bytes      # x + out, double-buffered
                 + 2 * C * C * act_bytes             # W1', W2' single-buffered
                 + C * 2 * 4)                        # biases (f32)
    vmem_limit = max(int(vmem_need * 1.5) + (2 << 20), 16 << 20)

    out = pl.pallas_call(
        channelmix_kernel,
        out_shape=jax.ShapeDtypeStruct((B, C, N), tokens.dtype),
        grid=grid,
        in_specs=[
            pl.BlockSpec((None, C, tn_eff), lambda b, n: (b, 0, n)),  # x tile
            pl.BlockSpec((C, C), lambda b, n: (0, 0),
                         pipeline_mode=pl.Buffered(1)),               # W1'
            pl.BlockSpec((C, C), lambda b, n: (0, 0),
                         pipeline_mode=pl.Buffered(1)),               # W2'
            pl.BlockSpec((C, 2), lambda b, n: (0, 0),
                         pipeline_mode=pl.Buffered(1)),               # biases
        ],
        out_specs=pl.BlockSpec((None, C, tn_eff), lambda b, n: (b, 0, n)),
        input_output_aliases=({0: 0} if donate_tokens else {}),
        compiler_params=pltpu.CompilerParams(
            dimension_semantics=("parallel", "parallel"),
            vmem_limit_bytes=vmem_limit),
    )(tokens, w1f, w2f, bias)

    return out


def reference(tokens, params):
    """Pure-JAX reference matching the PyTorch forward (BN in eval mode)."""
    w1, b1, w2, b2, gamma, beta, mean, var, scale = params
    x = tokens.astype(jnp.float32)                       # (B, C, N)
    xn = (x - mean[None, :, None]) / jnp.sqrt(var[None, :, None] + BN_EPS)
    xn = xn * gamma[None, :, None] + beta[None, :, None]
    h = jnp.einsum('oc,bcn->bon', w1, xn) + b1[None, :, None]
    h = jnp.maximum(h, 0.0)
    y = jnp.einsum('oc,bcn->bon', w2, h) + b2[None, :, None]
    return x + scale[None, :, None] * y


if __name__ == "__main__":
    # Small demo shapes; N intentionally NOT a multiple of 128 / the tile to
    # exercise the ragged-last-block path (no wrapper pad or slice anymore).
    B, C, N = 2, 32, 300

    key = jax.random.PRNGKey(0)
    ks = jax.random.split(key, 10)
    tokens = jax.random.normal(ks[0], (B, C, N), dtype=jnp.float32)

    # Deterministic synthetic parameters (shapes as in the module __init__).
    w1 = jax.random.normal(ks[1], (C, C), jnp.float32) * 0.1   # Conv1d(C,C,1).weight[...,0]
    b1 = jax.random.normal(ks[2], (C,),  jnp.float32) * 0.1
    w2 = jax.random.normal(ks[3], (C, C), jnp.float32) * 0.1
    b2 = jax.random.normal(ks[4], (C,),  jnp.float32) * 0.1
    gamma = 1.0 + 0.1 * jax.random.normal(ks[5], (C,), jnp.float32)   # BN weight
    beta = 0.1 * jax.random.normal(ks[6], (C,), jnp.float32)          # BN bias
    mean = 0.1 * jax.random.normal(ks[7], (C,), jnp.float32)          # BN running_mean
    var = jnp.abs(jax.random.normal(ks[8], (C,), jnp.float32)) + 0.5  # BN running_var
    scale = 0.1 * jax.random.normal(ks[9], (C,), jnp.float32)         # LayerScale
    params = (w1, b1, w2, b2, gamma, beta, mean, var, scale)

    out = jax.block_until_ready(channel_mix(tokens, params, tn=128))
    ref = reference(tokens, params)

    # BN/LayerScale folding reorders float ops slightly -> modest tolerance.
    np.testing.assert_allclose(np.asarray(out), np.asarray(ref),
                               rtol=1e-4, atol=1e-4)
    print("KERNEL_OK")
</pallas_src>

<mosaic_0001>
module attributes {stable_mosaic.version = 11 : i64} {
  func.func @channelmix_kernel(%arg0: i32, %arg1: i32, %arg2: memref<1x32x128xf32, #tpu.memory_space<vmem>>, %arg3: memref<32x32xf32, #tpu.memory_space<vmem>>, %arg4: memref<32x32xf32, #tpu.memory_space<vmem>>, %arg5: memref<32x2xf32, #tpu.memory_space<vmem>>, %arg6: memref<1x32x128xf32, #tpu.memory_space<vmem>>) attributes {dimension_semantics = [#tpu.dimension_semantics<parallel>, #tpu.dimension_semantics<parallel>], iteration_bounds = array<i64: 2, 3>, scalar_prefetch = 0 : i64, scratch_operands = 0 : i64, tpu.core_type = #tpu.core_type<tc>, window_params = [{transform_indices = @transform_0, window_bounds = array<i64: 1, 32, 128>}, {pipeline_mode = #tpu.pipeline_mode<synchronous>, transform_indices = @transform_1, window_bounds = array<i64: 32, 32>}, {pipeline_mode = #tpu.pipeline_mode<synchronous>, transform_indices = @transform_2, window_bounds = array<i64: 32, 32>}, {pipeline_mode = #tpu.pipeline_mode<synchronous>, transform_indices = @transform_3, window_bounds = array<i64: 32, 2>}, {transform_indices = @transform_4, window_bounds = array<i64: 1, 32, 128>}]} {
    %c0 = arith.constant 0 : index
    %c0_0 = arith.constant 0 : index
    %c0_1 = arith.constant 0 : index
    %0 = vector.load %arg2[%c0, %c0_0, %c0_1] : memref<1x32x128xf32, #tpu.memory_space<vmem>>, vector<1x32x128xf32>
    %1 = vector.shape_cast %0 : vector<1x32x128xf32> to vector<32x128xf32>
    %c0_2 = arith.constant 0 : index
    %c0_3 = arith.constant 0 : index
    %2 = vector.load %arg5[%c0_2, %c0_3] : memref<32x2xf32, #tpu.memory_space<vmem>>, vector<32x2xf32>
    %c0_4 = arith.constant 0 : index
    %c0_5 = arith.constant 0 : index
    %3 = vector.load %arg3[%c0_4, %c0_5] : memref<32x32xf32, #tpu.memory_space<vmem>>, vector<32x32xf32>
    %cst = arith.constant dense<0.000000e+00> : vector<32x128xf32>
    %4 = tpu.matmul %3, %1, %cst {dimension_numbers = #tpu.dot_dimension_numbers<[1], [0], [0], [1], [0, 0, 1, 1], [], []>} : vector<32x32xf32>, vector<32x128xf32>, vector<32x128xf32> -> vector<32x128xf32>
    %5 = vector.extract_strided_slice %2 {offsets = [0, 0], sizes = [32, 1], strides = [1, 1]} : vector<32x2xf32> to vector<32x1xf32>
    %6 = vector.broadcast %5 : vector<32x1xf32> to vector<32x128xf32>
    %7 = arith.addf %4, %6 : vector<32x128xf32>
    %cst_6 = arith.constant 0.000000e+00 : f32
    %8 = vector.broadcast %cst_6 : f32 to vector<32x128xf32>
    %9 = arith.maximumf %7, %8 : vector<32x128xf32>
    %c0_7 = arith.constant 0 : index
    %c0_8 = arith.constant 0 : index
    %10 = vector.load %arg4[%c0_7, %c0_8] : memref<32x32xf32, #tpu.memory_space<vmem>>, vector<32x32xf32>
    %cst_9 = arith.constant dense<0.000000e+00> : vector<32x128xf32>
    %11 = tpu.matmul %10, %9, %cst_9 {dimension_numbers = #tpu.dot_dimension_numbers<[1], [0], [0], [1], [0, 0, 1, 1], [], []>} : vector<32x32xf32>, vector<32x128xf32>, vector<32x128xf32> -> vector<32x128xf32>
    %12 = vector.extract_strided_slice %2 {offsets = [0, 1], sizes = [32, 1], strides = [1, 1]} : vector<32x2xf32> to vector<32x1xf32>
    %13 = vector.broadcast %12 : vector<32x1xf32> to vector<32x128xf32>
    %14 = arith.addf %11, %13 : vector<32x128xf32>
    %15 = arith.addf %1, %14 : vector<32x128xf32>
    %c0_10 = arith.constant 0 : index
    %c0_11 = arith.constant 0 : index
    %c0_12 = arith.constant 0 : index
    %16 = vector.load %arg6[%c0_10, %c0_11, %c0_12] : memref<1x32x128xf32, #tpu.memory_space<vmem>>, vector<1x32x128xf32>
    %17 = vector.shape_cast %16 : vector<1x32x128xf32> to vector<32x128xf32>
    %18 = vector.shape_cast %15 : vector<32x128xf32> to vector<1x32x128xf32>
    tpu.vector_store %arg6[%c0_10, %c0_11, %c0_12], %18 {strides = array<i32>} : memref<1x32x128xf32, #tpu.memory_space<vmem>>, vector<1x32x128xf32>,
    return
  }
  func.func @transform_0(%arg0: i32, %arg1: i32) -> (i32, i32, i32) {
    %c0_i32 = arith.constant 0 : i32
    %c0_i32_0 = arith.constant 0 : i32
    return %arg0, %c0_i32, %arg1 : i32, i32, i32
  }
  func.func @transform_1(%arg0: i32, %arg1: i32) -> (i32, i32) {
    %c0_i32 = arith.constant 0 : i32
    %c0_i32_0 = arith.constant 0 : i32
    %c0_i32_1 = arith.constant 0 : i32
    return %c0_i32, %c0_i32_0 : i32, i32
  }
  func.func @transform_2(%arg0: i32, %arg1: i32) -> (i32, i32) {
    %c0_i32 = arith.constant 0 : i32
    %c0_i32_0 = arith.constant 0 : i32
    %c0_i32_1 = arith.constant 0 : i32
    return %c0_i32, %c0_i32_0 : i32, i32
  }
  func.func @transform_3(%arg0: i32, %arg1: i32) -> (i32, i32) {
    %c0_i32 = arith.constant 0 : i32
    %c0_i32_0 = arith.constant 0 : i32
    %c0_i32_1 = arith.constant 0 : i32
    return %c0_i32, %c0_i32_0 : i32, i32
  }
  func.func @transform_4(%arg0: i32, %arg1: i32) -> (i32, i32, i32) {
    %c0_i32 = arith.constant 0 : i32
    %c0_i32_0 = arith.constant 0 : i32
    return %arg0, %c0_i32, %arg1 : i32, i32, i32
  }
}

</mosaic_0001>

<llo_original>
// kernel: tpu_custom_call.1
$region0: #{tpu_custom_call.1}
  #allocation0 [shape = 'u32[]', space=smem, size = 0x4, offset = 0x4, fixed_abs, tag = 'smem constant byte address 0x4 - core index']
  #allocation1 [shape = 'u32[144,128]{1,0:T(1,128)}', space=vmem, size = 0x12000, scoped, tag = 'internal scratch']
  %s0 = inlined_call_operand.hbm [shape: f32[2,32,300], index: 0, kind: input, shape index: {}]
  %s1 = inlined_call_operand.vmem [shape: f32[32,32], index: 1, kind: input, shape index: {}]
  %s2 = inlined_call_operand.hbm [shape: f32[32,32], index: 2, kind: input, shape index: {}]
  %s3 = inlined_call_operand.vmem [shape: f32[32,2], index: 3, kind: input, shape index: {}]
  %s4 = inlined_call_operand.hbm [shape: f32[2,32,300], index: 4, kind: output, shape index: {}]
  %s5 = sld [smem:[#allocation0]]
  $region57: #{tpu_custom_call.1} parent=0
    _
  %s7 = ssub.s32 1, %s5
  %s8 = scalar_select 0, %s7, %s5
  $region1: #{tpu_custom_call.1} parent=0
    #allocation2 [shape = 'u8[32768]{0}', space=vmem, size = 0x8000, scoped, tag = 'input window, operand 0']
    #allocation3 [shape = 's32[2]{0}', space=sflag, size = 0x8, scoped, tag = 'scoped memory for tpu_custom_call.1']
    #allocation4 [shape = 's32[2]{0}', space=sflag, size = 0x8, scoped, tag = 'scoped memory for tpu_custom_call.1']
    #allocation5 [shape = 'u8[16384]{0}', space=vmem, size = 0x4000, scoped, tag = 'input window, operand 2, single buffered']
    #allocation6 [shape = 's32[1]{0}', space=sflag, size = 0x4, scoped, tag = 'scoped memory for tpu_custom_call.1']
    #allocation7 [shape = 'u8[32768]{0}', space=vmem, size = 0x8000, scoped, tag = 'output window, operand 0']
    %9 = vsyncpa [#allocation3], 0
    %s10 = scalar_lea.sflag [#allocation3], 1
    %11 = vsyncpa %s10, 0
    %12 = vsyncpa [#allocation6], 0
    %13 = vsyncpa [#allocation4], 0
    %s14 = scalar_lea.sflag [#allocation4], 1
    %15 = vsyncpa %s14, 0
    loop: start=0, step=1, limit=8
    $region2: #{tpu_custom_call.1} parent=1 // loop_pre_header
      _
    $region3: #{tpu_custom_call.1} parent=1 // loop_header
      %s17 = sphi 0, %s21
      %p18 = scmp.ge.s32.totalorder %s17, 8
      %s24 = sphi 0, %s36
      %s25 = sphi 0, %s32
      %s26 = sphi 0, %s24
      %s27 = sphi 0, %s25
      %s28 = sphi 0, %s26
      %s29 = sphi 0, %s27
      %s41 = sphi 0, %s43
      %s44 = sphi 0, %s41
      %s45 = sphi 0, %s44
      %s61 = sphi 0, %s45
      %s65 = sphi 0, %s65
      %s67 = sphi 0, %s65
      %s68 = sphi 0, %s67
      %s82 = sphi 0, %s68
      %s86 = sphi 0, %s86
      %s88 = sphi 0, %s86
      %s89 = sphi 0, %s88
      %s103 = sphi 0, %s89
      %s107 = sphi 0, %s107
      %s109 = sphi 0, %s107
      %s110 = sphi 0, %s109
      %s124 = sphi 0, %s110
      %s132 = sphi 0, %s134
      %s135 = sphi 0, %s132
      %s136 = sphi 0, %s135
      %s152 = sphi 0, %s136
    $region4: #{tpu_custom_call.1} parent=1 // loop_header_branch
      %20 = sbr.rel (%p18) target = $region8
    $region5: #{tpu_custom_call.1} parent=1 // loop_body
      %s22 = ssub.s32 %s17, 1
      %s23 = ssub.s32 %s17, 2
      %s30 = sadd.s32 1, %s25
      %p31 = scmp.ge.s32.totalorder %s30, 3
      %s32 = scalar_select %p31, 0, %s30
      %s33 = sadd.s32 1, %s24
      %s34 = scalar_select %p31, %s33, %s24
      %p35 = scmp.ge.s32.totalorder %s34, 2
      %s36 = scalar_select %p35, 0, %s34
      %s37 = ssub.s32 %s24, %s36
      %s38 = ssub.s32 %s25, %s32
      %s39 = sor.u32 %s37, %s38
      %p40 = scmp.eq.s32.totalorder %s39, 0
      %s42 = sadd.s32 %s41, 1
      %s43 = scalar_select %p40, %s41, %s42
      %p46 = pneg %p40
      %p47 = scmp.eq.s32.totalorder %s17, 5
      %p48 = por %p46, %p47
      %p49 = scmp.ne.s32.totalorder %s41, %s44
      %p50 = scmp.eq.s32.totalorder %s17, 0
      %p51 = por %p49, %p50
      %p52 = scmp.ne.s32.totalorder %s41, %s44
      %p53 = scmp.eq.s32.totalorder %s22, 5
      %p54 = por %p52, %p53
      %p55 = scmp.ne.s32.totalorder %s44, %s45
      %p56 = scmp.eq.s32.totalorder %s22, 0
      %p57 = por %p55, %p56
      %p58 = scmp.ne.s32.totalorder %s44, %s45
      %p59 = scmp.eq.s32.totalorder %s23, 5
      %p60 = por %p58, %p59
      %p62 = scmp.ne.s32.totalorder %s45, %s61
      %p63 = scmp.eq.s32.totalorder %s23, 0
      %p64 = por %p62, %p63
      %s66 = sadd.s32 %s65, 1
      %p69 = scmp.eq.s32.totalorder %s17, 5
      %p70 = scmp.ne.s32.totalorder %s65, %s67
      %p71 = scmp.eq.s32.totalorder %s17, 0
      %p72 = por %p70, %p71
      %p73 = scmp.ne.s32.totalorder %s65, %s67
      %p74 = scmp.eq.s32.totalorder %s22, 5
      %p75 = por %p73, %p74
      %p76 = scmp.ne.s32.totalorder %s67, %s68
      %p77 = scmp.eq.s32.totalorder %s22, 0
      %p78 = por %p76, %p77
      %p79 = scmp.ne.s32.totalorder %s67, %s68
      %p80 = scmp.eq.s32.totalorder %s23, 5
      %p81 = por %p79, %p80
      %p83 = scmp.ne.s32.totalorder %s68, %s82
      %p84 = scmp.eq.s32.totalorder %s23, 0
      %p85 = por %p83, %p84
      %s87 = sadd.s32 %s86, 1
      %p90 = scmp.eq.s32.totalorder %s17, 5
      %p91 = scmp.ne.s32.totalorder %s86, %s88
      %p92 = scmp.eq.s32.totalorder %s17, 0
      %p93 = por %p91, %p92
      %p94 = scmp.ne.s32.totalorder %s86, %s88
      %p95 = scmp.eq.s32.totalorder %s22, 5
      %p96 = por %p94, %p95
      %p97 = scmp.ne.s32.totalorder %s88, %s89
      %p98 = scmp.eq.s32.totalorder %s22, 0
      %p99 = por %p97, %p98
      %p100 = scmp.ne.s32.totalorder %s88, %s89
      %p101 = scmp.eq.s32.totalorder %s23, 5
      %p102 = por %p100, %p101
      %p104 = scmp.ne.s32.totalorder %s89, %s103
      %p105 = scmp.eq.s32.totalorder %s23, 0
      %p106 = por %p104, %p105
      %s108 = sadd.s32 %s107, 1
      %p111 = scmp.eq.s32.totalorder %s17, 5
      %p112 = scmp.ne.s32.totalorder %s107, %s109
      %p113 = scmp.eq.s32.totalorder %s17, 0
      %p114 = por %p112, %p113
      %p115 = scmp.ne.s32.totalorder %s107, %s109
      %p116 = scmp.eq.s32.totalorder %s22, 5
      %p117 = por %p115, %p116
      %p118 = scmp.ne.s32.totalorder %s109, %s110
      %p119 = scmp.eq.s32.totalorder %s22, 0
      %p120 = por %p118, %p119
      %p121 = scmp.ne.s32.totalorder %s109, %s110
      %p122 = scmp.eq.s32.totalorder %s23, 5
      %p123 = por %p121, %p122
      %p125 = scmp.ne.s32.totalorder %s110, %s124
      %p126 = scmp.eq.s32.totalorder %s23, 0
      %p127 = por %p125, %p126
      %s128 = ssub.s32 %s24, %s36
      %s129 = ssub.s32 %s25, %s32
      %s130 = sor.u32 %s128, %s129
      %p131 = scmp.eq.s32.totalorder %s130, 0
      %s133 = sadd.s32 %s132, 1
      %s134 = scalar_select %p131, %s132, %s133
      %p137 = pneg %p131
      %p138 = scmp.eq.s32.totalorder %s17, 5
      %p139 = por %p137, %p138
      %p140 = scmp.ne.s32.totalorder %s132, %s135
      %p141 = scmp.eq.s32.totalorder %s17, 0
      %p142 = por %p140, %p141
      %p143 = scmp.ne.s32.totalorder %s132, %s135
      %p144 = scmp.eq.s32.totalorder %s22, 5
      %p145 = por %p143, %p144
      %p146 = scmp.ne.s32.totalorder %s135, %s136
      %p147 = scmp.eq.s32.totalorder %s22, 0
      %p148 = por %p146, %p147
      %p149 = scmp.ne.s32.totalorder %s135, %s136
      %p150 = scmp.eq.s32.totalorder %s23, 5
      %p151 = por %p149, %p150
      %p153 = scmp.ne.s32.totalorder %s136, %s152
      %p154 = scmp.eq.s32.totalorder %s23, 0
      %p155 = por %p153, %p154
      %p156 = scmp.le.s32.totalorder 1, %s17
      %p157 = scmp.lt.s32.totalorder %s17, 7
      %p158 = pnand %p156, %p157
      %p159 = pneg %p158
      // Predicated region
      $region9: #{tpu_custom_call.1} parent=5 // pred_check
        _
      $region10: #{tpu_custom_call.1} parent=5 // pred_check_branch
        %161 = sbr.rel (%p158) target = $region12
      $region11: #{tpu_custom_call.1} parent=5 // pred_region
        %s162 = ssub.s32 %s17, 1
        // Predicated region
        $region13: #{tpu_custom_call.1} parent=11 // pred_check
          %p163 = pneg %p78
        $region14: #{tpu_custom_call.1} parent=11 // pred_check_branch
          %165 = sbr.rel (%p163) target = $region16
        $region15: #{tpu_custom_call.1} parent=11 // pred_region
          _
        $region16: #{tpu_custom_call.1} parent=11 // pred_fallthru
          _
        // Predicated region
        $region17: #{tpu_custom_call.1} parent=11 // pred_check
          %p166 = pneg %p99
        $region18: #{tpu_custom_call.1} parent=11 // pred_check_branch
          %168 = sbr.rel (%p166) target = $region20
        $region19: #{tpu_custom_call.1} parent=11 // pred_region
          %s170 = ssub.s32 512, 512
          %171 = vsyncadd [#allocation6], %s170
          %s172 = sshll.u32 [#allocation5], 4
          %s173 = int_to_ptr.vmem [resolvable:$true] %s172
          %178 = dma.hbm_to_vmem [thread:$0]  %s2, 512, %s173, [#allocation6], 128, 128, 8
        $region20: #{tpu_custom_call.1} parent=11 // pred_fallthru
          _
        // Predicated region
        $region21: #{tpu_custom_call.1} parent=11 // pred_check
          %p179 = pneg %p120
        $region22: #{tpu_custom_call.1} parent=11 // pred_check_branch
          %181 = sbr.rel (%p179) target = $region24
        $region23: #{tpu_custom_call.1} parent=11 // pred_region
          _
        $region24: #{tpu_custom_call.1} parent=11 // pred_fallthru
          _
      $region12: #{tpu_custom_call.1} parent=5 // pred_fallthru
        _
      %p182 = scmp.lt.s32.totalorder %s17, 6
      // Predicated region
      $region25: #{tpu_custom_call.1} parent=5 // pred_check
        %p183 = pneg %p182
      $region26: #{tpu_custom_call.1} parent=5 // pred_check_branch
        %185 = sbr.rel (%p183) target = $region28
      $region27: #{tpu_custom_call.1} parent=5 // pred_region
        // Predicated region
        $region29: #{tpu_custom_call.1} parent=27 // pred_check
          %p186 = pneg %p51
        $region30: #{tpu_custom_call.1} parent=27 // pred_check_branch
          %188 = sbr.rel (%p186) target = $region32
        $region31: #{tpu_custom_call.1} parent=27 // pred_region
          %s189 = sand.u32 %s41, 1
          %s190 = scalar_lea.sflag [#allocation3], %s189
          %s191 = sand.u32 %s41, 1
          %s192 = smul.addr %s191, 32
          %s193 = scalar_lea.vmem [#allocation2], %s192
          %s195 = ssub.s32 512, 512
          %196 = vsyncadd %s190, %s195
          %s197 = smul.addr %s24, 12
          %s198 = sadd.s32 %s25, %s197
          %s199 = smul.addr %s198, 128
          %s200 = scalar_lea.hbm %s0, %s199
          %s201 = sshll.u32 %s193, 4
          %s202 = int_to_ptr.vmem [resolvable:$true] %s201
          %207 = dma.hbm_to_vmem [thread:$0]  %s200, 512, %s202, %s190, 384, 128, 8
        $region32: #{tpu_custom_call.1} parent=27 // pred_fallthru
          _
      $region28: #{tpu_custom_call.1} parent=5 // pred_fallthru
        _
      %p208 = scmp.le.s32.totalorder 1, %s17
      %p209 = scmp.lt.s32.totalorder %s17, 7
      %p210 = pnand %p208, %p209
      %p211 = pneg %p210
      // Predicated region
      $region33: #{tpu_custom_call.1} parent=5 // pred_check
        _
      $region34: #{tpu_custom_call.1} parent=5 // pred_check_branch
        %213 = sbr.rel (%p210) target = $region36
      $region35: #{tpu_custom_call.1} parent=5 // pred_region
        %s214 = ssub.s32 %s17, 1
        %s215 = sand.u32 %s44, 1
        %s216 = scalar_lea.sflag [#allocation3], %s215
        %s217 = sand.u32 %s44, 1
        %s218 = smul.addr %s217, 32
        %s219 = scalar_lea.vmem [#allocation2], %s218
        // Predicated region
        $region37: #{tpu_custom_call.1} parent=35 // pred_check
          %p220 = pneg %p57
        $region38: #{tpu_custom_call.1} parent=35 // pred_check_branch
          %222 = sbr.rel (%p220) target = $region40
        $region39: #{tpu_custom_call.1} parent=35 // pred_region
          %223 = dma.done %s216, 512
        $region40: #{tpu_custom_call.1} parent=35 // pred_fallthru
          _
        // Predicated region
        $region41: #{tpu_custom_call.1} parent=35 // pred_check
          %p224 = pneg %p99
        $region42: #{tpu_custom_call.1} parent=35 // pred_check_branch
          %226 = sbr.rel (%p224) target = $region44
        $region43: #{tpu_custom_call.1} parent=35 // pred_region
          %227 = dma.done [#allocation6], 512
        $region44: #{tpu_custom_call.1} parent=35 // pred_fallthru
          _
        %s228 = sand.u32 %s44, 1
        %s229 = scalar_lea.sflag [#allocation3], %s228
        %s230 = sand.u32 %s44, 1
        %s231 = smul.addr %s230, 32
        %s232 = scalar_lea.vmem [#allocation2], %s231
        %p233 = pneg %p57
        %p234 = pneg %p54
        %p235 = pneg %p78
        %p236 = pneg %p75
        %p237 = pneg %p99
        %p238 = pneg %p96
        %p239 = pneg %p120
        %p240 = pneg %p117
        %p241 = pneg %p148
        %p242 = pneg %p145
        %s243 = sand.u32 %s135, 1
        %s244 = scalar_lea.sflag [#allocation4], %s243
        %s245 = sand.u32 %s135, 1
        %s246 = smul.addr %s245, 32
        %s247 = scalar_lea.vmem [#allocation7], %s246
        %v248 = vld [vmem:[%s219] sm:$0xff]
        %v249 = vld [vmem:[%s219 + $0x8] sm:$0xff]
        %v250 = vld [vmem:[%s219 + $0x10] sm:$0xff]
        %v251 = vld [vmem:[%s219 + $0x18] sm:$0xff]
        %v252 = vld [vmem:[%s3] sm:$0xff]
        %v253 = vld [vmem:[%s3 + $0x8] sm:$0xff]
        %v254 = vld [vmem:[%s3 + $0x10] sm:$0xff]
        %v255 = vld [vmem:[%s3 + $0x18] sm:$0xff]
        %v256 = vld [vmem:[%s1] sm:$0xff]
        %v257 = vld [vmem:[%s1 + $0x8] sm:$0xff]
        %v258 = vld [vmem:[%s1 + $0x10] sm:$0xff]
        %v259 = vld [vmem:[%s1 + $0x18] sm:$0xff]
        %261 = vset.pattern.permute.xlu0 0
        %262 = vperm.xlu0 %261, %v252
        %v263 = vpop.permute.xlu0 %262
        %266 = vset.pattern.permute.xlu0 0
        %267 = vperm.xlu0 %266, %v253
        %v268 = vpop.permute.xlu0 %267
        %271 = vset.pattern.permute.xlu0 0
        %272 = vperm.xlu0 %271, %v254
        %v273 = vpop.permute.xlu0 %272
        %276 = vset.pattern.permute.xlu0 0
        %277 = vperm.xlu0 %276, %v255
        %v278 = vpop.permute.xlu0 %277
        %vm280 = vcmask 261120
        %v282 = vsel %vm280, %v256, 0
        %v285 = vsel %vm280, %v257, 0
        %v288 = vsel %vm280, %v258, 0
        %v291 = vsel %vm280, %v259, 0
        %293 = vmatprep.subr.mxu0 0.0
        %294 = vmatpush1.msra.mxu0 %v248
        %295 = vmatprep.subr.mxu0 0.0
        %296 = vmatpush1.msra.mxu0 %v249
        %297 = vmatprep.subr.mxu0 0.0
        %298 = vmatpush1.msra.mxu0 %v250
        %299 = vmatprep.subr.mxu0 0.0
        %300 = vmatpush1.msra.mxu0 %v251
        %301 = vmatprep.subr.mxu0 0.0
        %302 = vmatpush1.msra.mxu0 0.0
        %303 = vmatprep.subr.mxu0 0.0
        %304 = vmatpush1.msra.mxu0 0.0
        %305 = vmatprep.subr.mxu0 0.0
        %306 = vmatpush1.msra.mxu0 0.0
        %307 = vmatprep.subr.mxu0 0.0
        %308 = vmatpush1.msra.mxu0 0.0
        %309 = vmatprep.subr.mxu0 0.0
        %310 = vmatpush1.msra.mxu0 0.0
        %311 = vmatprep.subr.mxu0 0.0
        %312 = vmatpush1.msra.mxu0 0.0
        %313 = vmatprep.subr.mxu0 0.0
        %314 = vmatpush1.msra.mxu0 0.0
        %315 = vmatprep.subr.mxu0 0.0
        %316 = vmatpush1.msra.mxu0 0.0
        %317 = vmatprep.subr.mxu0 0.0
        %318 = vmatpush1.msra.mxu0 0.0
        %319 = vmatprep.subr.mxu0 0.0
        %320 = vmatpush1.msra.mxu0 0.0
        %321 = vmatprep.subr.mxu0 0.0
        %322 = vmatpush1.msra.mxu0 0.0
        %323 = vmatprep.subr.mxu0 0.0
        %324 = vmatpush1.msra.mxu0 0.0
        %325 = vmatprep.subr.mxu0 0.0
        %326 = vmatpush1.msra.mxu0 0.0
        %327 = vmatprep.subr.mxu0 0.0
        %328 = vmatpush1.msra.mxu0 0.0
        %329 = vmatprep.subr.mxu0 0.0
        %330 = vmatpush1.msra.mxu0 0.0
        %331 = vmatprep.subr.mxu0 0.0
        %332 = vmatpush1.msra.mxu0 0.0
        %333 = vmatprep.subr.mxu0 0.0
        %334 = vmatpush1.msra.mxu0 0.0
        %335 = vmatprep.subr.mxu0 0.0
        %336 = vmatpush1.msra.mxu0 0.0
        %337 = vmatprep.subr.mxu0 0.0
        %338 = vmatpush1.msra.mxu0 0.0
        %339 = vmatprep.subr.mxu0 0.0
        %340 = vmatpush1.msra.mxu0 0.0
        %341 = vmatprep.subr.mxu0 0.0
        %342 = vmatpush1.msra.mxu0 0.0
        %343 = vmatprep.subr.mxu0 0.0
        %344 = vmatpush1.msra.mxu0 0.0
        %345 = vmatprep.subr.mxu0 0.0
        %346 = vmatpush1.msra.mxu0 0.0
        %347 = vmatprep.subr.mxu0 0.0
        %348 = vmatpush1.msra.mxu0 0.0
        %349 = vmatprep.subr.mxu0 0.0
        %350 = vmatpush1.msra.mxu0 0.0
        %351 = vmatprep.subr.mxu0 0.0
        %352 = vmatpush1.msra.mxu0 0.0
        %353 = vmatprep.subr.mxu0 0.0
        %354 = vmatpush1.msra.mxu0 0.0
        %355 = vmatprep.subr.mxu0 0.0
        %356 = vmatpush1.msra.mxu0 0.0
        %357 = vmatprep.mubr.f32.mxu0 0.0
        %358 = vmatmul.mubr.f32.gmra.mrb[0].mxu0 %v282
        %v359 = vpop.f32.mrb[0].mxu0
        %v360 = vadd.f32 %v263, %v359
        %v361 = vpop.f32.mrb[0].mxu0
        %362 = vmatprep.mubr.f32.mxu0 0.0
        %363 = vmatmul.mubr.f32.gmra.mrb[0].mxu0 %v285
        %v364 = vpop.f32.mrb[0].mxu0
        %v365 = vadd.f32 %v268, %v364
        %v366 = vpop.f32.mrb[0].mxu0
        %367 = vmatprep.mubr.f32.mxu0 0.0
        %368 = vmatmul.mubr.f32.gmra.mrb[0].mxu0 %v288
        %v369 = vpop.f32.mrb[0].mxu0
        %v370 = vadd.f32 %v273, %v369
        %v371 = vpop.f32.mrb[0].mxu0
        %372 = vmatprep.mubr.f32.mxu0 0.0
        %373 = vmatmul.mubr.f32.gmra.mrb[0].mxu0 %v291
        %v374 = vpop.f32.mrb[0].mxu0
        %v375 = vadd.f32 %v278, %v374
        %v376 = vpop.f32.mrb[0].mxu0
        %377 = vdwg.mxu0
        %v378 = vmax.f32 %v360, 0.0
        %v379 = vmax.f32 %v365, 0.0
        %v380 = vmax.f32 %v370, 0.0
        %v381 = vmax.f32 %v375, 0.0
        %v382 = vld [vmem:[#allocation5] sm:$0xff]
        %v383 = vld [vmem:[#allocation5 + $0x8] sm:$0xff]
        %v384 = vld [vmem:[#allocation5 + $0x10] sm:$0xff]
        %v385 = vld [vmem:[#allocation5 + $0x18] sm:$0xff]
        %386 = vset.pattern.permute.xlu0 1
        %387 = vperm.xlu0 %386, %v252
        %v388 = vpop.permute.xlu0 %387
        %390 = vset.pattern.permute.xlu0 1
        %391 = vperm.xlu0 %390, %v253
        %v392 = vpop.permute.xlu0 %391
        %394 = vset.pattern.permute.xlu0 1
        %395 = vperm.xlu0 %394, %v254
        %v396 = vpop.permute.xlu0 %395
        %398 = vset.pattern.permute.xlu0 1
        %399 = vperm.xlu0 %398, %v255
        %v400 = vpop.permute.xlu0 %399
        %v403 = vsel %vm280, %v382, 0
        %v406 = vsel %vm280, %v383, 0
        %v409 = vsel %vm280, %v384, 0
        %v412 = vsel %vm280, %v385, 0
        %414 = vmatprep.subr.mxu0 0.0
        %415 = vmatpush1.msra.mxu0 %v378
        %416 = vmatprep.subr.mxu0 0.0
        %417 = vmatpush1.msra.mxu0 %v379
        %418 = vmatprep.subr.mxu0 0.0
        %419 = vmatpush1.msra.mxu0 %v380
        %420 = vmatprep.subr.mxu0 0.0
        %421 = vmatpush1.msra.mxu0 %v381
        %422 = vmatprep.subr.mxu0 0.0
        %423 = vmatpush1.msra.mxu0 0.0
        %424 = vmatprep.subr.mxu0 0.0
        %425 = vmatpush1.msra.mxu0 0.0
        %426 = vmatprep.subr.mxu0 0.0
        %427 = vmatpush1.msra.mxu0 0.0
        %428 = vmatprep.subr.mxu0 0.0
        %429 = vmatpush1.msra.mxu0 0.0
        %430 = vmatprep.subr.mxu0 0.0
        %431 = vmatpush1.msra.mxu0 0.0
        %432 = vmatprep.subr.mxu0 0.0
        %433 = vmatpush1.msra.mxu0 0.0
        %434 = vmatprep.subr.mxu0 0.0
        %435 = vmatpush1.msra.mxu0 0.0
        %436 = vmatprep.subr.mxu0 0.0
        %437 = vmatpush1.msra.mxu0 0.0
        %438 = vmatprep.subr.mxu0 0.0
        %439 = vmatpush1.msra.mxu0 0.0
        %440 = vmatprep.subr.mxu0 0.0
        %441 = vmatpush1.msra.mxu0 0.0
        %442 = vmatprep.subr.mxu0 0.0
        %443 = vmatpush1.msra.mxu0 0.0
        %444 = vmatprep.subr.mxu0 0.0
        %445 = vmatpush1.msra.mxu0 0.0
        %446 = vmatprep.subr.mxu0 0.0
        %447 = vmatpush1.msra.mxu0 0.0
        %448 = vmatprep.subr.mxu0 0.0
        %449 = vmatpush1.msra.mxu0 0.0
        %450 = vmatprep.subr.mxu0 0.0
        %451 = vmatpush1.msra.mxu0 0.0
        %452 = vmatprep.subr.mxu0 0.0
        %453 = vmatpush1.msra.mxu0 0.0
        %454 = vmatprep.subr.mxu0 0.0
        %455 = vmatpush1.msra.mxu0 0.0
        %456 = vmatprep.subr.mxu0 0.0
        %457 = vmatpush1.msra.mxu0 0.0
        %458 = vmatprep.subr.mxu0 0.0
        %459 = vmatpush1.msra.mxu0 0.0
        %460 = vmatprep.subr.mxu0 0.0
        %461 = vmatpush1.msra.mxu0 0.0
        %462 = vmatprep.subr.mxu0 0.0
        %463 = vmatpush1.msra.mxu0 0.0
        %464 = vmatprep.subr.mxu0 0.0
        %465 = vmatpush1.msra.mxu0 0.0
        %466 = vmatprep.subr.mxu0 0.0
        %467 = vmatpush1.msra.mxu0 0.0
        %468 = vmatprep.subr.mxu0 0.0
        %469 = vmatpush1.msra.mxu0 0.0
        %470 = vmatprep.subr.mxu0 0.0
        %471 = vmatpush1.msra.mxu0 0.0
        %472 = vmatprep.subr.mxu0 0.0
        %473 = vmatpush1.msra.mxu0 0.0
        %474 = vmatprep.subr.mxu0 0.0
        %475 = vmatpush1.msra.mxu0 0.0
        %476 = vmatprep.subr.mxu0 0.0
        %477 = vmatpush1.msra.mxu0 0.0
        %478 = vmatprep.mubr.f32.mxu0 0.0
        %479 = vmatmul.mubr.f32.gmra.mrb[0].mxu0 %v403
        %v480 = vpop.f32.mrb[0].mxu0
        %v481 = vadd.f32 %v388, %v480
        %v482 = vpop.f32.mrb[0].mxu0
        %483 = vmatprep.mubr.f32.mxu0 0.0
        %484 = vmatmul.mubr.f32.gmra.mrb[0].mxu0 %v406
        %v485 = vpop.f32.mrb[0].mxu0
        %v486 = vadd.f32 %v392, %v485
        %v487 = vpop.f32.mrb[0].mxu0
        %488 = vmatprep.mubr.f32.mxu0 0.0
        %489 = vmatmul.mubr.f32.gmra.mrb[0].mxu0 %v409
        %v490 = vpop.f32.mrb[0].mxu0
        %v491 = vadd.f32 %v396, %v490
        %v492 = vpop.f32.mrb[0].mxu0
        %493 = vmatprep.mubr.f32.mxu0 0.0
        %494 = vmatmul.mubr.f32.gmra.mrb[0].mxu0 %v412
        %v495 = vpop.f32.mrb[0].mxu0
        %v496 = vadd.f32 %v400, %v495
        %v497 = vpop.f32.mrb[0].mxu0
        %498 = vdwg.mxu0
        %v499 = vadd.f32 %v248, %v481
        %v500 = vadd.f32 %v249, %v486
        %v501 = vadd.f32 %v250, %v491
        %v502 = vadd.f32 %v251, %v496
        %503 = vst [vmem:[%s247] sm:$0xff] %v499
        %504 = vst [vmem:[%s247 + $0x8] sm:$0xff] %v500
        %505 = vst [vmem:[%s247 + $0x10] sm:$0xff] %v501
        %506 = vst [vmem:[%s247 + $0x18] sm:$0xff] %v502
        %s507 = sand.u32 %s135, 1
        %s508 = scalar_lea.sflag [#allocation4], %s507
        %s509 = sand.u32 %s135, 1
        %s510 = smul.addr %s509, 32
        %s511 = scalar_lea.vmem [#allocation7], %s510
        // Predicated region
        $region45: #{tpu_custom_call.1} parent=35 // pred_check
          %p512 = pneg %p145
        $region46: #{tpu_custom_call.1} parent=35 // pred_check_branch
          %514 = sbr.rel (%p512) target = $region48
        $region47: #{tpu_custom_call.1} parent=35 // pred_region
          %s516 = ssub.s32 512, 512
          %517 = vsyncadd %s508, %s516
          %s518 = smul.addr %s26, 12
          %s519 = sadd.s32 %s27, %s518
          %s520 = smul.addr %s519, 128
          %s521 = scalar_lea.hbm %s4, %s520
          %s522 = sshll.u32 %s511, 4
          %s523 = int_to_ptr.vmem [resolvable:$true] %s522
          %528 = dma.vmem_to_hbm [thread:$0]  %s523, 512, %s521, %s508, 128, 384, 8
        $region48: #{tpu_custom_call.1} parent=35 // pred_fallthru
          _
      $region36: #{tpu_custom_call.1} parent=5 // pred_fallthru
        _
      %p529 = scmp.le.s32.totalorder 2, %s17
      // Predicated region
      $region49: #{tpu_custom_call.1} parent=5 // pred_check
        %p530 = pneg %p529
      $region50: #{tpu_custom_call.1} parent=5 // pred_check_branch
        %532 = sbr.rel (%p530) target = $region52
      $region51: #{tpu_custom_call.1} parent=5 // pred_region
        %s533 = ssub.s32 %s17, 2
        // Predicated region
        $region53: #{tpu_custom_call.1} parent=51 // pred_check
          %p534 = pneg %p151
        $region54: #{tpu_custom_call.1} parent=51 // pred_check_branch
          %536 = sbr.rel (%p534) target = $region56
        $region55: #{tpu_custom_call.1} parent=51 // pred_region
          %s537 = sand.u32 %s136, 1
          %s538 = scalar_lea.sflag [#allocation4], %s537
          %s539 = sand.u32 %s136, 1
          %s540 = smul.addr %s539, 32
          %s541 = scalar_lea.vmem [#allocation7], %s540
          %542 = dma.done %s538, 512
        $region56: #{tpu_custom_call.1} parent=51 // pred_fallthru
          _
      $region52: #{tpu_custom_call.1} parent=5 // pred_fallthru
        _
    $region6: #{tpu_custom_call.1} parent=1 // loop_footer
      %s21 = sadd.s32 1, %s17
    $region7: #{tpu_custom_call.1} parent=1 // loop_footer_branch
      %16 = sbr.rel target = $region3
    $region8: #{tpu_custom_call.1} parent=1 // loop_exit
      _
    %543 = vsyncpa [#allocation3], 1
    %s544 = scalar_lea.sflag [#allocation3], 1
    %545 = vsyncpa %s544, 1
    %546 = vsyncpa [#allocation6], 1
    %547 = vsyncpa [#allocation4], 1
    %s548 = scalar_lea.sflag [#allocation4], 1
    %549 = vsyncpa %s548, 1

</llo_original>
